<compile_context>
chip_gen: v7x
topology: tpu7x:2x2x1
jax: 0.10.0
libtpu: 0.0.40
codegen_flags: <defaults>
</compile_context>

<pallas_src>
import functools
import math

import jax
import jax.numpy as jnp
from jax.experimental import pallas as pl
from jax.experimental.pallas import tpu as pltpu

ACT_DTYPE = jnp.bfloat16      # activation / matmul-operand dtype (f32 accumulate)
PARAM_DTYPE = jnp.bfloat16    # matmul weight dtype (biases / LN params stay f32)
LN_EPS = 1e-5
_SQRT_2_OVER_PI = 0.7978845608028654

# Whole-array-in-VMEM BlockSpec (no grid, single kernel invocation).
_VMEM_FULL = pl.BlockSpec(memory_space=pltpu.MemorySpace.VMEM)


def _gelu_tanh(h):
    # tanh-approx GELU: runs on the EUP instead of a long erf VPU polynomial.
    return 0.5 * h * (1.0 + jnp.tanh(_SQRT_2_OVER_PI * (h + 0.044715 * h * h * h)))


def _layernorm(z, gamma, beta):
    mean = jnp.mean(z, axis=-1, keepdims=True)
    var = jnp.mean((z - mean) ** 2, axis=-1, keepdims=True)
    return (z - mean) * jax.lax.rsqrt(var + LN_EPS) * gamma + beta


def _vmem_limit(need_bytes):
    """Scoped-VMEM budget derived from the chip's physical VMEM capacity."""
    try:
        cap = int(getattr(pltpu.get_tpu_info(), "vmem_capacity_bytes", 64 << 20))
    except Exception:
        cap = 64 << 20
    ceiling = max(cap - (8 << 20), 32 << 20)
    return int(min(max(int(need_bytes) + (16 << 20), 32 << 20), ceiling))


# ---------------------------------------------------------------------------
# Kernels
# ---------------------------------------------------------------------------
def _ln_kernel(x_ref, g_ref, b_ref, o_ref):
    x = x_ref[...].astype(jnp.float32)
    o_ref[...] = _layernorm(x, g_ref[...], b_ref[...]).astype(o_ref.dtype)


def _decoder_layer_kernel(x_ref, tok_ref, wqkv_ref, bqkv_ref, wo_ref, bo_ref,
                          g1_ref, beta1_ref, w1_ref, b1_ref, w2_ref, b2_ref,
                          g2_ref, beta2_ref, o_ref, ctx_ref,
                          *, batch, seq, n_heads, d_k):
    D = n_heads * d_k
    N = batch * seq
    # Module hard-codes 1/sqrt(64); with d_k=64 this is identical.
    scale = jnp.float32(1.0 / math.sqrt(d_k))

    x_bf = x_ref[...]                           # (N, D) bf16
    x_f32 = x_bf.astype(jnp.float32)

    # ---- fused QKV projection: one (N,D) x (D,3D) bf16 MXU matmul --------
    qkv = jnp.dot(x_bf, wqkv_ref[...],
                  preferred_element_type=jnp.float32) + bqkv_ref[...]
    # (reshape in f32 keeps the split layout-free when T % 8 == 0)
    qkv = qkv.reshape(batch, seq, 3 * D).astype(ACT_DTYPE)

    # ---- additive attention-mask bias built in-kernel from token ids -----
    tok = tok_ref[...]                                          # (B, T) int32
    pad = jnp.broadcast_to((tok == 0)[:, None, :], (batch, seq, seq))
    rows = jax.lax.broadcasted_iota(jnp.int32, (seq, seq), 0)
    cols = jax.lax.broadcasted_iota(jnp.int32, (seq, seq), 1)
    causal = jnp.broadcast_to((cols > rows)[None, :, :], (batch, seq, seq))
    bias = jnp.where(jnp.logical_or(pad, causal),
                     jnp.float32(-1e9), jnp.float32(0.0))        # (B, T, T)

    # ---- per-head masked softmax attention, batched over B ---------------
    for h in range(n_heads):
        qh = qkv[:, :, h * d_k:(h + 1) * d_k]                    # (B, T, dk) bf16
        kh = qkv[:, :, D + h * d_k:D + (h + 1) * d_k]
        vh = qkv[:, :, 2 * D + h * d_k:2 * D + (h + 1) * d_k]
        s = jnp.einsum("bqd,bkd->bqk", qh, kh,
                       preferred_element_type=jnp.float32) * scale + bias
        m = jnp.max(s, axis=-1, keepdims=True)
        p = jnp.exp(s - m)
        p = p * pl.reciprocal(jnp.sum(p, axis=-1, keepdims=True), approx=True)
        # TODO(synk): Dropout(0.3) on attention probabilities is identity.
        ctx_h = jnp.einsum("bqk,bkd->bqd", p.astype(ACT_DTYPE), vh,
                           preferred_element_type=jnp.float32)
        ctx_ref[:, :, h * d_k:(h + 1) * d_k] = ctx_h             # f32 scratch slice

    # ---- output projection + residual + LayerNorm -------------------------
    context = ctx_ref[...].reshape(N, D).astype(ACT_DTYPE)
    attn = jnp.dot(context, wo_ref[...],
                   preferred_element_type=jnp.float32) + bo_ref[...]
    x_mid = _layernorm(attn + x_f32, g1_ref[...], beta1_ref[...]).astype(ACT_DTYPE)

    # ---- feed forward: linear1 -> GELU -> linear2 -> residual -> LN ------
    hcol = jnp.dot(x_mid, w1_ref[...],
                   preferred_element_type=jnp.float32) + b1_ref[...]
    hcol = _gelu_tanh(hcol)
    y = jnp.dot(hcol.astype(ACT_DTYPE), w2_ref[...],
                preferred_element_type=jnp.float32) + b2_ref[...]
    # TODO(synk): Feed_Forward Dropout(0.3) is identity (inference mode).
    z = y + x_mid.astype(jnp.float32)
    o_ref[...] = _layernorm(z, g2_ref[...], beta2_ref[...]).astype(o_ref.dtype)


# ---------------------------------------------------------------------------
# Wrappers
# ---------------------------------------------------------------------------
@jax.jit
def embedding_layernorm(emb2, gamma, beta):
    """LayerNorm over the (B*T, D) embedding rows (single VMEM block)."""
    N, D = emb2.shape
    need = N * D * (4 + 2) + 2 * D * 4
    return pl.pallas_call(
        _ln_kernel,
        out_shape=jax.ShapeDtypeStruct((N, D), ACT_DTYPE),
        in_specs=[_VMEM_FULL, _VMEM_FULL, _VMEM_FULL],
        out_specs=_VMEM_FULL,
        compiler_params=pltpu.CompilerParams(vmem_limit_bytes=_vmem_limit(need)),
    )(emb2, gamma.reshape(1, D), beta.reshape(1, D))


@functools.partial(jax.jit, static_argnames=("n_heads", "d_k"))
def decoder_layer(x2, tokens, lp, *, n_heads=12, d_k=64):
    """One fused DecoderBlock (MHA + FFN) as a single pallas_call."""
    N, D = x2.shape
    B, T = tokens.shape
    assert N == B * T and D == n_heads * d_k
    H = lp["w1"].shape[1]

    wi = jnp.dtype(PARAM_DTYPE).itemsize
    w_bytes = (3 * D * D + D * D + 2 * D * H) * wi + (3 * D + 2 * D + H + 4 * D) * 4
    act_bytes = 2 * N * D * 2 + N * D * 4                 # x in / out, ctx scratch
    tmp_bytes = N * (3 * D + H + 4 * D) * 4 + 3 * B * T * T * 4

    kern = functools.partial(_decoder_layer_kernel,
                             batch=B, seq=T, n_heads=n_heads, d_k=d_k)
    return pl.pallas_call(
        kern,
        out_shape=jax.ShapeDtypeStruct((N, D), ACT_DTYPE),
        in_specs=[_VMEM_FULL] * 14,
        out_specs=_VMEM_FULL,
        scratch_shapes=[pltpu.VMEM((B, T, D), jnp.float32)],   # per-head context
        compiler_params=pltpu.CompilerParams(
            vmem_limit_bytes=_vmem_limit(w_bytes + act_bytes + tmp_bytes)),
    )(x2, tokens,
      lp["wqkv"], lp["bqkv"].reshape(1, 3 * D),
      lp["wo"], lp["bo"].reshape(1, D),
      lp["attn_gamma"].reshape(1, D), lp["attn_beta"].reshape(1, D),
      lp["w1"], lp["b1"].reshape(1, H),
      lp["w2"], lp["b2"].reshape(1, D),
      lp["ffn_gamma"].reshape(1, D), lp["ffn_beta"].reshape(1, D))


def decoder_forward(tokens, params, *, n_heads=12, d_k=64):
    B, T = tokens.shape
    D = params["tok_emb"].shape[1]
    pos = jnp.arange(T)
    # Embedding gathers stay in JAX (no Pallas win at this scale).
    emb = (jnp.take(params["tok_emb"], tokens, axis=0)
           + jnp.take(params["pos_emb"], pos, axis=0)[None])
    # TODO(synk): EmbeddingLayer Dropout(0.3) is identity (inference mode).
    x2 = embedding_layernorm(emb.reshape(B * T, D),
                             params["emb_gamma"], params["emb_beta"])
    for lp in params["layers"]:
        x2 = decoder_layer(x2, tokens, lp, n_heads=n_heads, d_k=d_k)
    return x2.reshape(B, T, D)


# ---------------------------------------------------------------------------
# Parameters + pure-JAX reference (mirrors the kernel dtype strategy)
# ---------------------------------------------------------------------------
def init_params(key, vocab_size, *, d_model=768, n_layers=2, maxlen=52):
    h_dim = 4 * d_model
    k_tok, k_pos, *layer_keys = jax.random.split(key, 2 + n_layers)

    def linear(k, fan_in, fan_out):
        kw, kb = jax.random.split(k)
        lim = 1.0 / (fan_in ** 0.5)
        w = jax.random.uniform(kw, (fan_in, fan_out), jnp.float32, -lim, lim)
        b = jax.random.uniform(kb, (fan_out,), jnp.float32, -lim, lim)
        return w.astype(PARAM_DTYPE), b          # weights bf16, biases f32

    params = {
        "tok_emb": jax.random.normal(k_tok, (vocab_size, d_model), jnp.float32),
        "pos_emb": jax.random.normal(k_pos, (maxlen, d_model), jnp.float32),
        "emb_gamma": jnp.ones((d_model,), jnp.float32),
        "emb_beta": jnp.zeros((d_model,), jnp.float32),
        "layers": [],
    }
    for lk in layer_keys:
        ks = jax.random.split(lk, 6)
        wq, bq = linear(ks[0], d_model, d_model)
        wk, bk = linear(ks[1], d_model, d_model)
        wv, bv = linear(ks[2], d_model, d_model)
        wo, bo = linear(ks[3], d_model, d_model)
        w1, b1 = linear(ks[4], d_model, h_dim)
        w2, b2 = linear(ks[5], h_dim, d_model)
        params["layers"].append(dict(
            wqkv=jnp.concatenate([wq, wk, wv], axis=1),   # (D, 3D) fused QKV, bf16
            bqkv=jnp.concatenate([bq, bk, bv]),           # (3D,) f32
            wo=wo, bo=bo,
            attn_gamma=jnp.ones((d_model,), jnp.float32),
            attn_beta=jnp.zeros((d_model,), jnp.float32),
            w1=w1, b1=b1, w2=w2, b2=b2,
            ffn_gamma=jnp.ones((d_model,), jnp.float32),
            ffn_beta=jnp.zeros((d_model,), jnp.float32)))
    return params


def build_attention_mask(tokens):
    """pad mask OR causal mask, bool (True = masked). Shape (B, T, T)."""
    B, T = tokens.shape
    pad = jnp.broadcast_to((tokens == 0)[:, None, :], (B, T, T))
    causal = (jnp.triu(jnp.ones((T, T), jnp.int32), 1) > 0)[None]
    return jnp.logical_or(pad, causal)


def reference_decoder(tokens, params, *, n_heads=12, d_k=64):
    B, T = tokens.shape
    D = params["tok_emb"].shape[1]
    mask = build_attention_mask(tokens)
    pos = jnp.arange(T)
    emb = (jnp.take(params["tok_emb"], tokens, axis=0)
           + jnp.take(params["pos_emb"], pos, axis=0)[None])
    x = _layernorm(emb, params["emb_gamma"], params["emb_beta"]).astype(ACT_DTYPE)
    scale = 1.0 / math.sqrt(d_k)
    for lp in params["layers"]:
        qkv = (jnp.dot(x.reshape(B * T, D), lp["wqkv"],
                       preferred_element_type=jnp.float32)
               + lp["bqkv"]).reshape(B, T, 3, n_heads, d_k).astype(ACT_DTYPE)
        q = qkv[:, :, 0].transpose(0, 2, 1, 3)           # (B, H, T, dk)
        k = qkv[:, :, 1].transpose(0, 2, 1, 3)
        v = qkv[:, :, 2].transpose(0, 2, 1, 3)
        s = jnp.einsum("bhqd,bhkd->bhqk", q, k,
                       preferred_element_type=jnp.float32) * scale
        s = jnp.where(mask[:, None], jnp.float32(-1e9), s)
        p = jax.nn.softmax(s, axis=-1)
        ctx = jnp.einsum("bhqk,bhkd->bhqd", p.astype(ACT_DTYPE), v,
                         preferred_element_type=jnp.float32)
        ctx = ctx.transpose(0, 2, 1, 3).reshape(B * T, D).astype(ACT_DTYPE)
        o = jnp.dot(ctx, lp["wo"], preferred_element_type=jnp.float32) + lp["bo"]
        x = _layernorm(o.reshape(B, T, D) + x.astype(jnp.float32),
                       lp["attn_gamma"], lp["attn_beta"]).astype(ACT_DTYPE)
        h = _gelu_tanh(jnp.dot(x.reshape(B * T, D), lp["w1"],
                               preferred_element_type=jnp.float32) + lp["b1"])
        y = jnp.dot(h.astype(ACT_DTYPE), lp["w2"],
                    preferred_element_type=jnp.float32) + lp["b2"]
        x = _layernorm(y.reshape(B, T, D) + x.astype(jnp.float32),
                       lp["ffn_gamma"], lp["ffn_beta"]).astype(ACT_DTYPE)
    return x


if __name__ == "__main__":
    B, T = 2, 8
    D_MODEL, N_LAYERS, VOCAB = 768, 2, 50     # d_model=768 is the module default

    key = jax.random.PRNGKey(0)
    k_tok, k_param = jax.random.split(key)
    tokens = jax.random.randint(k_tok, (B, T), 1, VOCAB, dtype=jnp.int32)
    tokens = tokens.at[0, T - 1].set(0)       # exercise the pad-mask path
    params = init_params(k_param, VOCAB, d_model=D_MODEL, n_layers=N_LAYERS)

    out = decoder_forward(tokens, params)
    out = jax.block_until_ready(out)
    assert out.shape == (B, T, D_MODEL)

    ref = reference_decoder(tokens, params)
    err = float(jnp.max(jnp.abs(out.astype(jnp.float32) - ref.astype(jnp.float32))))
    assert err < 0.1, f"mismatch vs reference (max abs err {err})"

    print("KERNEL_OK")
</pallas_src>

<mosaic_0001>
module attributes {stable_mosaic.version = 11 : i64} {
  func.func @_ln_kernel(%arg0: memref<16x768xf32, #tpu.memory_space<vmem>>, %arg1: memref<1x768xf32, #tpu.memory_space<vmem>>, %arg2: memref<1x768xf32, #tpu.memory_space<vmem>>, %arg3: memref<16x768xbf16, #tpu.memory_space<vmem>>) attributes {dimension_semantics = [], scalar_prefetch = 0 : i64, scratch_operands = 0 : i64, tpu.core_type = #tpu.core_type<tc>} {
    %c0 = arith.constant 0 : index
    %c0_0 = arith.constant 0 : index
    %0 = vector.load %arg0[%c0, %c0_0] : memref<16x768xf32, #tpu.memory_space<vmem>>, vector<16x768xf32>
    %c0_1 = arith.constant 0 : index
    %c0_2 = arith.constant 0 : index
    %1 = vector.load %arg1[%c0_1, %c0_2] : memref<1x768xf32, #tpu.memory_space<vmem>>, vector<1x768xf32>
    %c0_3 = arith.constant 0 : index
    %c0_4 = arith.constant 0 : index
    %2 = vector.load %arg2[%c0_3, %c0_4] : memref<1x768xf32, #tpu.memory_space<vmem>>, vector<1x768xf32>
    %cst = arith.constant dense<0.000000e+00> : vector<16xf32>
    %3 = vector.multi_reduction <add>, %0, %cst [1] : vector<16x768xf32> to vector<16xf32>
    %4 = vector.shape_cast %3 : vector<16xf32> to vector<16x1xf32>
    %cst_5 = arith.constant 7.680000e+02 : f32
    %5 = vector.broadcast %cst_5 : f32 to vector<16x1xf32>
    %6 = arith.divf %4, %5 : vector<16x1xf32>
    %7 = vector.broadcast %6 : vector<16x1xf32> to vector<16x768xf32>
    %8 = arith.subf %0, %7 : vector<16x768xf32>
    %9 = arith.mulf %8, %8 : vector<16x768xf32>
    %cst_6 = arith.constant dense<0.000000e+00> : vector<16xf32>
    %10 = vector.multi_reduction <add>, %9, %cst_6 [1] : vector<16x768xf32> to vector<16xf32>
    %11 = vector.shape_cast %10 : vector<16xf32> to vector<16x1xf32>
    %cst_7 = arith.constant 7.680000e+02 : f32
    %12 = vector.broadcast %cst_7 : f32 to vector<16x1xf32>
    %13 = arith.divf %11, %12 : vector<16x1xf32>
    %14 = vector.broadcast %6 : vector<16x1xf32> to vector<16x768xf32>
    %15 = arith.subf %0, %14 : vector<16x768xf32>
    %cst_8 = arith.constant 9.99999974E-6 : f32
    %16 = vector.broadcast %cst_8 : f32 to vector<16x1xf32>
    %17 = arith.addf %13, %16 : vector<16x1xf32>
    %18 = math.rsqrt %17 : vector<16x1xf32>
    %19 = vector.broadcast %18 : vector<16x1xf32> to vector<16x768xf32>
    %20 = arith.mulf %15, %19 : vector<16x768xf32>
    %21 = vector.broadcast %1 : vector<1x768xf32> to vector<16x768xf32>
    %22 = arith.mulf %20, %21 : vector<16x768xf32>
    %23 = vector.broadcast %2 : vector<1x768xf32> to vector<16x768xf32>
    %24 = arith.addf %22, %23 : vector<16x768xf32>
    %25 = arith.truncf %24 : vector<16x768xf32> to vector<16x768xbf16>
    %c0_9 = arith.constant 0 : index
    %c0_10 = arith.constant 0 : index
    %26 = vector.load %arg3[%c0_9, %c0_10] : memref<16x768xbf16, #tpu.memory_space<vmem>>, vector<16x768xbf16>
    tpu.vector_store %arg3[%c0_9, %c0_10], %25 {strides = array<i32>} : memref<16x768xbf16, #tpu.memory_space<vmem>>, vector<16x768xbf16>,
    return
  }
}

</mosaic_0001>

<llo_original>
// kernel: embedding_layernorm.1
$region0: #{embedding_layernorm.1}
  #allocation0 [shape = 'u32[]', space=smem, size = 0x4, offset = 0x4, fixed_abs, tag = 'smem constant byte address 0x4 - core index']
  #allocation1 [shape = 'u32[144,128]{1,0:T(1,128)}', space=vmem, size = 0x12000, scoped, tag = 'internal scratch']
  %s0 = inlined_call_operand.hbm [shape: f32[16,768], index: 0, kind: input, shape index: {}]
  %s1 = inlined_call_operand.vmem [shape: f32[1,768], index: 1, kind: input, shape index: {}]
  %s2 = inlined_call_operand.vmem [shape: f32[1,768], index: 2, kind: input, shape index: {}]
  %s3 = inlined_call_operand.hbm [shape: bf16[16,768], index: 3, kind: output, shape index: {}]
  %s4 = sld [smem:[#allocation0]]
  $region26: #{embedding_layernorm.1} parent=0
    _
  %s6 = ssub.s32 1, %s4
  %s7 = scalar_select 0, %s6, %s4
  $region1: #{embedding_layernorm.1} parent=0
    #allocation2 [shape = 'u8[49152]{0}', space=vmem, size = 0xc000, scoped, tag = 'input window, operand 0, single buffered']
    #allocation3 [shape = 's32[1]{0}', space=sflag, size = 0x4, scoped, tag = 'scoped memory for embedding_layernorm.1']
    #allocation4 [shape = 's32[1]{0}', space=sflag, size = 0x4, scoped, tag = 'scoped memory for embedding_layernorm.1']
    #allocation5 [shape = 'u8[24576]{0}', space=vmem, size = 0x6000, scoped, tag = 'output window, operand 0, single buffered']
    %8 = vsyncpa [#allocation3], 0
    %9 = vsyncpa [#allocation4], 0
    // Predicated region
    $region2: #{embedding_layernorm.1} parent=1 // pred_check
      _
    $region3: #{embedding_layernorm.1} parent=1 // pred_check_branch
      %11 = sbr.rel (0) target = $region5
    $region4: #{embedding_layernorm.1} parent=1 // pred_region
      %s13 = ssub.s32 1536, 1536
      %14 = vsyncadd [#allocation3], %s13
      %s15 = sshll.u32 [#allocation2], 4
      %s16 = int_to_ptr.vmem [resolvable:$true] %s15
      %21 = dma.hbm_to_vmem [thread:$0]  %s0, 1536, %s16, [#allocation3], 768, 768, 48
    $region5: #{embedding_layernorm.1} parent=1 // pred_fallthru
      _
    // Predicated region
    $region6: #{embedding_layernorm.1} parent=1 // pred_check
      _
    $region7: #{embedding_layernorm.1} parent=1 // pred_check_branch
      %23 = sbr.rel (0) target = $region9
    $region8: #{embedding_layernorm.1} parent=1 // pred_region
      _
    $region9: #{embedding_layernorm.1} parent=1 // pred_fallthru
      _
    // Predicated region
    $region10: #{embedding_layernorm.1} parent=1 // pred_check
      _
    $region11: #{embedding_layernorm.1} parent=1 // pred_check_branch
      %25 = sbr.rel (0) target = $region13
    $region12: #{embedding_layernorm.1} parent=1 // pred_region
      _
    $region13: #{embedding_layernorm.1} parent=1 // pred_fallthru
      _
    // Predicated region
    $region14: #{embedding_layernorm.1} parent=1 // pred_check
      _
    $region15: #{embedding_layernorm.1} parent=1 // pred_check_branch
      %27 = sbr.rel (0) target = $region17
    $region16: #{embedding_layernorm.1} parent=1 // pred_region
      %28 = dma.done [#allocation3], 1536
    $region17: #{embedding_layernorm.1} parent=1 // pred_fallthru
      _
    %v29 = vld [vmem:[#allocation2] sm:$0xff]
    %v30 = vld [vmem:[#allocation2 + $0x8] sm:$0xff]
    %v31 = vld [vmem:[#allocation2 + $0x10] sm:$0xff]
    %v32 = vld [vmem:[#allocation2 + $0x18] sm:$0xff]
    %v33 = vld [vmem:[#allocation2 + $0x20] sm:$0xff]
    %v34 = vld [vmem:[#allocation2 + $0x28] sm:$0xff]
    %v35 = vld [vmem:[#allocation2 + $0x30] sm:$0xff]
    %v36 = vld [vmem:[#allocation2 + $0x38] sm:$0xff]
    %v37 = vld [vmem:[#allocation2 + $0x40] sm:$0xff]
    %v38 = vld [vmem:[#allocation2 + $0x48] sm:$0xff]
    %v39 = vld [vmem:[#allocation2 + $0x50] sm:$0xff]
    %v40 = vld [vmem:[#allocation2 + $0x58] sm:$0xff]
    %v41 = vld [vmem:[%s1] sm:$0x3f]
    %v42 = vld [vmem:[%s2] sm:$0x3f]
    %v43 = vadd.f32 %v29, %v30
    %v44 = vadd.f32 %v43, %v31
    %v45 = vadd.f32 %v44, %v32
    %v46 = vadd.f32 %v45, %v33
    %v47 = vadd.f32 %v46, %v34
    %48 = vadd.xlane.f32.xlu0 %v47
    %v49 = vpop.xlane.xlu0 %48
    %v50 = vadd.f32 %v35, %v36
    %v51 = vadd.f32 %v50, %v37
    %v52 = vadd.f32 %v51, %v38
    %v53 = vadd.f32 %v52, %v39
    %v54 = vadd.f32 %v53, %v40
    %55 = vadd.xlane.f32.xlu0 %v54
    %v56 = vpop.xlane.xlu0 %55
    %v57 = vrcp.pop 768.0
    %v58 = vmul.f32 %v49, %v57
    %v59 = vmul.f32 %v56, %v57
    %v60 = vsub.f32 %v29, %v58
    %v61 = vsub.f32 %v30, %v58
    %v62 = vsub.f32 %v31, %v58
    %v63 = vsub.f32 %v32, %v58
    %v64 = vsub.f32 %v33, %v58
    %v65 = vsub.f32 %v34, %v58
    %v66 = vsub.f32 %v35, %v59
    %v67 = vsub.f32 %v36, %v59
    %v68 = vsub.f32 %v37, %v59
    %v69 = vsub.f32 %v38, %v59
    %v70 = vsub.f32 %v39, %v59
    %v71 = vsub.f32 %v40, %v59
    %v72 = vmul.f32 %v60, %v60
    %v73 = vmul.f32 %v61, %v61
    %v74 = vmul.f32 %v62, %v62
    %v75 = vmul.f32 %v63, %v63
    %v76 = vmul.f32 %v64, %v64
    %v77 = vmul.f32 %v65, %v65
    %v78 = vmul.f32 %v66, %v66
    %v79 = vmul.f32 %v67, %v67
    %v80 = vmul.f32 %v68, %v68
    %v81 = vmul.f32 %v69, %v69
    %v82 = vmul.f32 %v70, %v70
    %v83 = vmul.f32 %v71, %v71
    %v84 = vadd.f32 %v72, %v73
    %v85 = vadd.f32 %v84, %v74
    %v86 = vadd.f32 %v85, %v75
    %v87 = vadd.f32 %v86, %v76
    %v88 = vadd.f32 %v87, %v77
    %89 = vadd.xlane.f32.xlu0 %v88
    %v90 = vpop.xlane.xlu0 %89
    %v91 = vadd.f32 %v78, %v79
    %v92 = vadd.f32 %v91, %v80
    %v93 = vadd.f32 %v92, %v81
    %v94 = vadd.f32 %v93, %v82
    %v95 = vadd.f32 %v94, %v83
    %96 = vadd.xlane.f32.xlu0 %v95
    %v97 = vpop.xlane.xlu0 %96
    %v98 = vmul.f32 %v90, %v57
    %v99 = vmul.f32 %v97, %v57
    %v100 = vadd.f32 %v98, 1e-05
    %v101 = vadd.f32 %v99, 1e-05
    %v102 = vrsqrt.pop %v100
    %v103 = vrsqrt.pop %v101
    %v104 = vmul.f32 %v60, %v102
    %v105 = vmul.f32 %v61, %v102
    %v106 = vmul.f32 %v62, %v102
    %v107 = vmul.f32 %v63, %v102
    %v108 = vmul.f32 %v64, %v102
    %v109 = vmul.f32 %v65, %v102
    %v110 = vmul.f32 %v66, %v103
    %v111 = vmul.f32 %v67, %v103
    %v112 = vmul.f32 %v68, %v103
    %v113 = vmul.f32 %v69, %v103
    %v114 = vmul.f32 %v70, %v103
    %v115 = vmul.f32 %v71, %v103
    %v117 = vlaneseq
    %v118 = vshrl.u32 %v117, 7
    %v119 = vsub.s32 0, %v118
    %v120 = vrot.slane %v41, %v119
    %v121 = vlaneseq
    %v122 = vshrl.u32 %v121, 7
    %v123 = vsub.s32 1, %v122
    %v124 = vrot.slane %v41, %v123
    %v125 = vlaneseq
    %v126 = vshrl.u32 %v125, 7
    %v127 = vsub.s32 2, %v126
    %v128 = vrot.slane %v41, %v127
    %v129 = vlaneseq
    %v130 = vshrl.u32 %v129, 7
    %v131 = vsub.s32 3, %v130
    %v132 = vrot.slane %v41, %v131
    %v133 = vlaneseq
    %v134 = vshrl.u32 %v133, 7
    %v135 = vsub.s32 4, %v134
    %v136 = vrot.slane %v41, %v135
    %v137 = vlaneseq
    %v138 = vshrl.u32 %v137, 7
    %v139 = vsub.s32 5, %v138
    %v140 = vrot.slane %v41, %v139
    %v147 = vmul.f32 %v104, %v120
    %v148 = vmul.f32 %v105, %v124
    %v149 = vmul.f32 %v106, %v128
    %v150 = vmul.f32 %v107, %v132
    %v151 = vmul.f32 %v108, %v136
    %v152 = vmul.f32 %v109, %v140
    %v153 = vmul.f32 %v110, %v120
    %v154 = vmul.f32 %v111, %v124
    %v155 = vmul.f32 %v112, %v128
    %v156 = vmul.f32 %v113, %v132
    %v157 = vmul.f32 %v114, %v136
    %v158 = vmul.f32 %v115, %v140
    %v160 = vlaneseq
    %v161 = vshrl.u32 %v160, 7
    %v162 = vsub.s32 0, %v161
    %v163 = vrot.slane %v42, %v162
    %v164 = vlaneseq
    %v165 = vshrl.u32 %v164, 7
    %v166 = vsub.s32 1, %v165
    %v167 = vrot.slane %v42, %v166
    %v168 = vlaneseq
    %v169 = vshrl.u32 %v168, 7
    %v170 = vsub.s32 2, %v169
    %v171 = vrot.slane %v42, %v170
    %v172 = vlaneseq
    %v173 = vshrl.u32 %v172, 7
    %v174 = vsub.s32 3, %v173
    %v175 = vrot.slane %v42, %v174
    %v176 = vlaneseq
    %v177 = vshrl.u32 %v176, 7
    %v178 = vsub.s32 4, %v177
    %v179 = vrot.slane %v42, %v178
    %v180 = vlaneseq
    %v181 = vshrl.u32 %v180, 7
    %v182 = vsub.s32 5, %v181
    %v183 = vrot.slane %v42, %v182
    %v190 = vadd.f32 %v147, %v163
    %v191 = vadd.f32 %v148, %v167
    %v192 = vadd.f32 %v149, %v171
    %v193 = vadd.f32 %v150, %v175
    %v194 = vadd.f32 %v151, %v179
    %v195 = vadd.f32 %v152, %v183
    %v196 = vadd.f32 %v153, %v163
    %v197 = vadd.f32 %v154, %v167
    %v198 = vadd.f32 %v155, %v171
    %v199 = vadd.f32 %v156, %v175
    %v200 = vadd.f32 %v157, %v179
    %v201 = vadd.f32 %v158, %v183
    %v202 = vpack.c.bf16 %v196, %v190
    %v203 = vpack.c.bf16 %v197, %v191
    %v204 = vpack.c.bf16 %v198, %v192
    %v205 = vpack.c.bf16 %v199, %v193
    %v206 = vpack.c.bf16 %v200, %v194
    %v207 = vpack.c.bf16 %v201, %v195
    %v214 = vunpack.c.l.b16 %v202
    %v215 = vunpack.c.l.b16 %v203
    %v216 = vunpack.c.l.b16 %v204
    %v217 = vunpack.c.l.b16 %v205
    %v218 = vunpack.c.l.b16 %v206
    %v219 = vunpack.c.l.b16 %v207
    %v220 = vunpack.c.h.b16 %v202
    %v221 = vunpack.c.h.b16 %v203
    %v222 = vunpack.c.h.b16 %v204
    %v223 = vunpack.c.h.b16 %v205
    %v224 = vunpack.c.h.b16 %v206
    %v225 = vunpack.c.h.b16 %v207
    %v226 = vpack.c.b16 %v215, %v214
    %v227 = vpack.c.b16 %v217, %v216
    %v228 = vpack.c.b16 %v219, %v218
    %v229 = vpack.c.b16 %v221, %v220
    %v230 = vpack.c.b16 %v223, %v222
    %v231 = vpack.c.b16 %v225, %v224
    %238 = vst [vmem:[#allocation5] sm:$0xff] %v226
    %239 = vst [vmem:[#allocation5 + $0x8] sm:$0xff] %v227
    %240 = vst [vmem:[#allocation5 + $0x10] sm:$0xff] %v228
    %241 = vst [vmem:[#allocation5 + $0x18] sm:$0xff] %v229
    %242 = vst [vmem:[#allocation5 + $0x20] sm:$0xff] %v230
    %243 = vst [vmem:[#allocation5 + $0x28] sm:$0xff] %v231
    // Predicated region
    $region18: #{embedding_layernorm.1} parent=1 // pred_check
      _
    $region19: #{embedding_layernorm.1} parent=1 // pred_check_branch
      %245 = sbr.rel (0) target = $region21
    $region20: #{embedding_layernorm.1} parent=1 // pred_region
      %s247 = ssub.s32 768, 768
      %248 = vsyncadd [#allocation4], %s247
      %s249 = sshll.u32 [#allocation5], 4
      %s250 = int_to_ptr.vmem [resolvable:$true] %s249
      %255 = dma.vmem_to_hbm [thread:$0]  %s250, 768, %s3, [#allocation4], 384, 384, 24
    $region21: #{embedding_layernorm.1} parent=1 // pred_fallthru
      _
    // Predicated region
    $region22: #{embedding_layernorm.1} parent=1 // pred_check
      _
    $region23: #{embedding_layernorm.1} parent=1 // pred_check_branch
      %257 = sbr.rel (0) target = $region25
    $region24: #{embedding_layernorm.1} parent=1 // pred_region
      %258 = dma.done [#allocation4], 768
    $region25: #{embedding_layernorm.1} parent=1 // pred_fallthru
      _
    %259 = vsyncpa [#allocation3], 1
    %260 = vsyncpa [#allocation4], 1

</llo_original>
